<compile_context>
chip_gen: v7x
topology: tpu7x:2x2x1
jax: 0.10.0
libtpu: 0.0.40
codegen_flags: <defaults>
</compile_context>

<pallas_src>
import jax
import jax.numpy as jnp
from jax.experimental import pallas as pl
from jax.experimental.pallas import tpu as pltpu

LANE = 128
H1_PAD = 128     # Linear(n_input, 100) padded to 128 lanes
H2_PAD = 128     # Linear(100, 50)      padded to 128 lanes
_BN_EPS = 1e-5


def _round_up(a, m):
    return (a + m - 1) // m * m


# -----------------------------------------------------------------------------
# Kernel
# -----------------------------------------------------------------------------
def cph_dl_kernel(x_ref, w1_ref, b1_ref, w2_ref, b2_ref, wc_ref, out_ref):
    # f_fc1 + f_relu1 (f_drop1 is identity in eval mode).
    # bf16 MXU operands, f32 accumulation; bias/ReLU in f32.
    h1 = jnp.dot(x_ref[...], w1_ref[...], preferred_element_type=jnp.float32)
    h1 = jnp.maximum(h1 + b1_ref[...], 0.0)

    # f_fc2 + f_relu2 (f_drop2 identity in eval mode).
    h2 = jnp.dot(h1.astype(jnp.bfloat16), w2_ref[...],
                 preferred_element_type=jnp.float32)
    h2 = jnp.maximum(h2 + b2_ref[...], 0.0)

    # c_bn1 (folded into wc on the host) + c_f2: Linear(50, 1), computed as
    # wc_row @ h2^T so the per-step result is a lane-dense (1, tb) row (no
    # sublane-padded (tb, 1) intermediate, no masked stores).  The Cox bias is
    # contributed by the constant-one column h2[:, 50] * wc[:, 50].
    out_ref[...] = jax.lax.dot_general(
        wc_ref[...], h2,
        dimension_numbers=(((1,), (1,)), ((), ())),
        preferred_element_type=jnp.float32)


# -----------------------------------------------------------------------------
# Host-side parameter folding / padding
# -----------------------------------------------------------------------------
def fold_and_pad_params(p):
    """Fold eval-mode BN + Cox bias into the final reduction, pad hidden dims
    to 128 lanes, cast MXU weights to bf16."""
    n_input = p["w1"].shape[0]

    scale = p["bn_gamma"] * jax.lax.rsqrt(p["bn_var"] + _BN_EPS)          # (1, 50)
    wc_fold = p["wc"] * scale.T                                           # (50, 1)
    bc_fold = p["bc"] + (p["bn_beta"] - p["bn_mean"] * scale) @ p["wc"]   # (1, 1)

    w1 = jnp.zeros((n_input, H1_PAD), jnp.float32).at[:, :100].set(p["w1"])
    b1 = jnp.zeros((1, H1_PAD), jnp.float32).at[:, :100].set(p["b1"])
    w2 = jnp.zeros((H1_PAD, H2_PAD), jnp.float32).at[:100, :50].set(p["w2"])
    # b2[:, 50] = 1 makes h2[:, 50] == relu(0 + 1) == 1 (w2 column 50 is zero),
    # so wc[:, 50] = bc folds the Cox bias into the reduction exactly.
    b2 = (jnp.zeros((1, H2_PAD), jnp.float32)
          .at[:, :50].set(p["b2"]).at[:, 50].set(1.0))
    wc = (jnp.zeros((1, H2_PAD), jnp.float32)
          .at[:, :50].set(wc_fold[:, 0]).at[:, 50].set(bc_fold[0, 0]))
    return w1.astype(jnp.bfloat16), b1, w2.astype(jnp.bfloat16), b2, wc


# -----------------------------------------------------------------------------
# Tiling / VMEM budgeting
# -----------------------------------------------------------------------------
def _vmem_budget_bytes():
    """Generation-aware scoped-VMEM budget (leave ~25% headroom)."""
    cap = 64 * 1024 * 1024                      # conservative default (v7x/TC)
    try:
        cap = int(getattr(pltpu.get_tpu_info(), "vmem_capacity_bytes", cap))
    except Exception:
        pass
    cap = min(cap, 128 * 1024 * 1024)
    return max(32 * 1024 * 1024, (cap // 4) * 3)


def _choose_tiling(B, n_input, vmem_budget):
    """Pick the batch tile tb and the number of grid steps."""
    bp8 = _round_up(B, 8)
    # Per-batch-row VMEM (bytes):
    #   x block bf16, double-buffered : 4 * n_input
    #   h1 f32 + h1 bf16 + h2 f32     : 512 + 256 + 512
    #   (1, tb) f32 out x2 + slack    : ~576
    per_row = 4 * n_input + 1856
    # Resident constants (assume double-buffered in case Buffered(1) is
    # unavailable): bf16 w1/w2 plus three (8,128)-padded f32 vectors.
    const_bytes = 2 * (n_input * H1_PAD * 2 + H1_PAD * H2_PAD * 2
                       + 3 * 8 * LANE * 4)
    # TODO(synk): for very large n_input, w1 alone exceeds VMEM -> needs a
    # trailing "arbitrary" K-tiling grid axis with an f32 accumulator.
    avail = max(vmem_budget - const_bytes, 1 << 20)
    tb = avail // per_row
    # ~4 MiB of streamed x per grid step amortizes the ~0.35 us/step overhead.
    tb = min(tb, (4 * 1024 * 1024) // max(2 * n_input, 1))
    # Guarantee >= 2 grid steps whenever the batch allows it, so the
    # "parallel" batch axis gives both TensorCores work on v7x.
    if bp8 >= 2 * LANE:
        tb = min(tb, _round_up(pl.cdiv(bp8, 2), LANE))
    if tb >= bp8:
        return bp8, 1                            # single tile == whole batch
    tb = max(LANE, (tb // LANE) * LANE)          # lane-dense (1, tb) out rows
    return tb, pl.cdiv(bp8, tb)


# -----------------------------------------------------------------------------
# pallas_call wrapper
# -----------------------------------------------------------------------------
def _build_forward(n_input, tb, n_tiles, bp, vmem_limit, single_buffer_consts):
    if single_buffer_consts and hasattr(pl, "Buffered"):
        cmode = dict(pipeline_mode=pl.Buffered(1))   # constants: single buffer
    else:
        cmode = {}

    def const(shape):
        return pl.BlockSpec(shape, lambda i: (0, 0), **cmode)

    return pl.pallas_call(
        cph_dl_kernel,
        out_shape=jax.ShapeDtypeStruct((1, bp), jnp.float32),
        grid=(n_tiles,),
        in_specs=[
            pl.BlockSpec((tb, n_input), lambda i: (i, 0)),   # x: streamed
            const((n_input, H1_PAD)),                        # VMEM-resident
            const((1, H1_PAD)),
            const((H1_PAD, H2_PAD)),
            const((1, H2_PAD)),
            const((1, H2_PAD)),
        ],
        out_specs=pl.BlockSpec((1, tb), lambda i: (0, i)),   # lane-dense rows
        compiler_params=pltpu.CompilerParams(
            dimension_semantics=("parallel",),               # dual-TC on v7x
            vmem_limit_bytes=int(vmem_limit)),
    )


def cph_dl_forward(x, params):
    """x: (B, n_input) float32.  Returns (B, 1) float32 (eval-mode forward)."""
    B, n_input = x.shape
    w1, b1, w2, b2, wc = fold_and_pad_params(params)

    vmem_budget = _vmem_budget_bytes()
    tb, n_tiles = _choose_tiling(B, n_input, vmem_budget)
    bp = tb * n_tiles

    x_lp = x.astype(jnp.bfloat16)       # halve HBM bytes of the streamed operand
    if bp != B:
        x_lp = jnp.pad(x_lp, ((0, bp - B), (0, 0)))

    args = (x_lp, w1, b1, w2, b2, wc)
    try:
        out = _build_forward(n_input, tb, n_tiles, bp, vmem_budget, True)(*args)
    except Exception:
        # pl.Buffered(1) rejected by this build -> default double buffering.
        out = _build_forward(n_input, tb, n_tiles, bp, vmem_budget, False)(*args)
    return out.reshape(-1, 1)[:B]


# -----------------------------------------------------------------------------
# Deterministic init + references
# -----------------------------------------------------------------------------
def init_params(key, n_input):
    """Mirrors PyTorch Linear/BN shapes (weights stored as (in, out)).
    BN stats are made non-trivial so the host-side fold is actually tested."""
    ks = jax.random.split(key, 10)

    def linear(kw, kb, fan_in, fan_out):
        bound = 1.0 / jnp.sqrt(fan_in)
        w = jax.random.uniform(kw, (fan_in, fan_out), jnp.float32, -bound, bound)
        b = jax.random.uniform(kb, (1, fan_out), jnp.float32, -bound, bound)
        return w, b

    w1, b1 = linear(ks[0], ks[1], n_input, 100)   # f_fc1
    w2, b2 = linear(ks[2], ks[3], 100, 50)        # f_fc2
    wc, bc = linear(ks[4], ks[5], 50, 1)          # c_f2

    return dict(
        w1=w1, b1=b1, w2=w2, b2=b2,
        bn_gamma=jax.random.uniform(ks[6], (1, 50), jnp.float32, 0.5, 1.5),
        bn_beta=jax.random.normal(ks[7], (1, 50), jnp.float32) * 0.1,
        bn_mean=jax.random.normal(ks[8], (1, 50), jnp.float32) * 0.1,
        bn_var=jax.random.uniform(ks[9], (1, 50), jnp.float32, 0.5, 1.5),
        wc=wc, bc=bc,
    )


def reference_forward_f32(x, p):
    h1 = jnp.maximum(x @ p["w1"] + p["b1"], 0.0)
    h2 = jnp.maximum(h1 @ p["w2"] + p["b2"], 0.0)
    hn = ((h2 - p["bn_mean"]) / jnp.sqrt(p["bn_var"] + _BN_EPS)
          * p["bn_gamma"] + p["bn_beta"])
    return hn @ p["wc"] + p["bc"]


def reference_forward_matched(x, p):
    """Same bf16 matmul-operand casts as the kernel (f32 accumulation)."""
    h1 = jnp.dot(x.astype(jnp.bfloat16), p["w1"].astype(jnp.bfloat16),
                 preferred_element_type=jnp.float32) + p["b1"]
    h1 = jnp.maximum(h1, 0.0)
    h2 = jnp.dot(h1.astype(jnp.bfloat16), p["w2"].astype(jnp.bfloat16),
                 preferred_element_type=jnp.float32) + p["b2"]
    h2 = jnp.maximum(h2, 0.0)
    scale = p["bn_gamma"] * jax.lax.rsqrt(p["bn_var"] + _BN_EPS)
    wc_fold = p["wc"] * scale.T
    bc_fold = p["bc"] + (p["bn_beta"] - p["bn_mean"] * scale) @ p["wc"]
    return h2 @ wc_fold + bc_fold


if __name__ == "__main__":
    key = jax.random.PRNGKey(0)
    k_x, k_p, k_x2 = jax.random.split(key, 3)

    # Small single-tile case.
    B, n_input = 8, 32
    x = jax.random.normal(k_x, (B, n_input), jnp.float32)
    params = init_params(k_p, n_input)

    out = jax.block_until_ready(cph_dl_forward(x, params))
    assert out.shape == (B, 1)
    ref_m = reference_forward_matched(x, params)
    ref_f = reference_forward_f32(x, params)
    assert jnp.allclose(out, ref_m, atol=1e-3, rtol=1e-3), "mismatch vs matched ref"
    assert jnp.allclose(out, ref_f, atol=1e-1, rtol=1e-1), "mismatch vs f32 ref"

    # Multi-tile case: exercises batch padding, >=2 grid steps, lane-dense rows.
    B2 = 300
    x2 = jax.random.normal(k_x2, (B2, n_input), jnp.float32)
    out2 = jax.block_until_ready(cph_dl_forward(x2, params))
    assert out2.shape == (B2, 1)
    ref2 = reference_forward_matched(x2, params)
    assert jnp.allclose(out2, ref2, atol=1e-3, rtol=1e-3), "mismatch (multi-tile)"

    print("KERNEL_OK")
</pallas_src>

<mosaic_0001>
module attributes {stable_mosaic.version = 11 : i64} {
  func.func @cph_dl_kernel(%arg0: i32, %arg1: memref<8x32xbf16, #tpu.memory_space<vmem>>, %arg2: memref<32x128xbf16, #tpu.memory_space<vmem>>, %arg3: memref<1x128xf32, #tpu.memory_space<vmem>>, %arg4: memref<128x128xbf16, #tpu.memory_space<vmem>>, %arg5: memref<1x128xf32, #tpu.memory_space<vmem>>, %arg6: memref<1x128xf32, #tpu.memory_space<vmem>>, %arg7: memref<1x8xf32, #tpu.memory_space<vmem>>) attributes {dimension_semantics = [#tpu.dimension_semantics<parallel>], iteration_bounds = array<i64: 1>, scalar_prefetch = 0 : i64, scratch_operands = 0 : i64, tpu.core_type = #tpu.core_type<tc>, window_params = [{transform_indices = @transform_0, window_bounds = array<i64: 8, 32>}, {pipeline_mode = #tpu.pipeline_mode<synchronous>, transform_indices = @transform_1, window_bounds = array<i64: 32, 128>}, {pipeline_mode = #tpu.pipeline_mode<synchronous>, transform_indices = @transform_2, window_bounds = array<i64: 1, 128>}, {pipeline_mode = #tpu.pipeline_mode<synchronous>, transform_indices = @transform_3, window_bounds = array<i64: 128, 128>}, {pipeline_mode = #tpu.pipeline_mode<synchronous>, transform_indices = @transform_4, window_bounds = array<i64: 1, 128>}, {pipeline_mode = #tpu.pipeline_mode<synchronous>, transform_indices = @transform_5, window_bounds = array<i64: 1, 128>}, {transform_indices = @transform_6, window_bounds = array<i64: 1, 8>}]} {
    %c0 = arith.constant 0 : index
    %c0_0 = arith.constant 0 : index
    %0 = vector.load %arg1[%c0, %c0_0] : memref<8x32xbf16, #tpu.memory_space<vmem>>, vector<8x32xbf16>
    %c0_1 = arith.constant 0 : index
    %c0_2 = arith.constant 0 : index
    %1 = vector.load %arg2[%c0_1, %c0_2] : memref<32x128xbf16, #tpu.memory_space<vmem>>, vector<32x128xbf16>
    %cst = arith.constant dense<0.000000e+00> : vector<8x128xf32>
    %2 = tpu.matmul %0, %1, %cst {dimension_numbers = #tpu.dot_dimension_numbers<[1], [0], [0], [1], [0, 0, 1, 1], [], []>} : vector<8x32xbf16>, vector<32x128xbf16>, vector<8x128xf32> -> vector<8x128xf32>
    %c0_3 = arith.constant 0 : index
    %c0_4 = arith.constant 0 : index
    %3 = vector.load %arg3[%c0_3, %c0_4] : memref<1x128xf32, #tpu.memory_space<vmem>>, vector<1x128xf32>
    %4 = vector.broadcast %3 : vector<1x128xf32> to vector<8x128xf32>
    %5 = arith.addf %2, %4 : vector<8x128xf32>
    %cst_5 = arith.constant 0.000000e+00 : f32
    %6 = vector.broadcast %cst_5 : f32 to vector<8x128xf32>
    %7 = arith.maximumf %5, %6 : vector<8x128xf32>
    %8 = arith.truncf %7 : vector<8x128xf32> to vector<8x128xbf16>
    %c0_6 = arith.constant 0 : index
    %c0_7 = arith.constant 0 : index
    %9 = vector.load %arg4[%c0_6, %c0_7] : memref<128x128xbf16, #tpu.memory_space<vmem>>, vector<128x128xbf16>
    %cst_8 = arith.constant dense<0.000000e+00> : vector<8x128xf32>
    %10 = tpu.matmul %8, %9, %cst_8 {dimension_numbers = #tpu.dot_dimension_numbers<[1], [0], [0], [1], [0, 0, 1, 1], [], []>} : vector<8x128xbf16>, vector<128x128xbf16>, vector<8x128xf32> -> vector<8x128xf32>
    %c0_9 = arith.constant 0 : index
    %c0_10 = arith.constant 0 : index
    %11 = vector.load %arg5[%c0_9, %c0_10] : memref<1x128xf32, #tpu.memory_space<vmem>>, vector<1x128xf32>
    %12 = vector.broadcast %11 : vector<1x128xf32> to vector<8x128xf32>
    %13 = arith.addf %10, %12 : vector<8x128xf32>
    %cst_11 = arith.constant 0.000000e+00 : f32
    %14 = vector.broadcast %cst_11 : f32 to vector<8x128xf32>
    %15 = arith.maximumf %13, %14 : vector<8x128xf32>
    %c0_12 = arith.constant 0 : index
    %c0_13 = arith.constant 0 : index
    %16 = vector.load %arg6[%c0_12, %c0_13] : memref<1x128xf32, #tpu.memory_space<vmem>>, vector<1x128xf32>
    %cst_14 = arith.constant dense<0.000000e+00> : vector<1x8xf32>
    %17 = tpu.matmul %16, %15, %cst_14 {dimension_numbers = #tpu.dot_dimension_numbers<[1], [1], [0], [0], [0, 0, 1, 0], [], []>} : vector<1x128xf32>, vector<8x128xf32>, vector<1x8xf32> -> vector<1x8xf32>
    %c0_15 = arith.constant 0 : index
    %c0_16 = arith.constant 0 : index
    %18 = vector.load %arg7[%c0_15, %c0_16] : memref<1x8xf32, #tpu.memory_space<vmem>>, vector<1x8xf32>
    tpu.vector_store %arg7[%c0_15, %c0_16], %17 {strides = array<i32>} : memref<1x8xf32, #tpu.memory_space<vmem>>, vector<1x8xf32>,
    return
  }
  func.func @transform_0(%arg0: i32) -> (i32, i32) {
    %c0_i32 = arith.constant 0 : i32
    %c0_i32_0 = arith.constant 0 : i32
    return %arg0, %c0_i32 : i32, i32
  }
  func.func @transform_1(%arg0: i32) -> (i32, i32) {
    %c0_i32 = arith.constant 0 : i32
    %c0_i32_0 = arith.constant 0 : i32
    %c0_i32_1 = arith.constant 0 : i32
    return %c0_i32, %c0_i32_0 : i32, i32
  }
  func.func @transform_2(%arg0: i32) -> (i32, i32) {
    %c0_i32 = arith.constant 0 : i32
    %c0_i32_0 = arith.constant 0 : i32
    %c0_i32_1 = arith.constant 0 : i32
    return %c0_i32, %c0_i32_0 : i32, i32
  }
  func.func @transform_3(%arg0: i32) -> (i32, i32) {
    %c0_i32 = arith.constant 0 : i32
    %c0_i32_0 = arith.constant 0 : i32
    %c0_i32_1 = arith.constant 0 : i32
    return %c0_i32, %c0_i32_0 : i32, i32
  }
  func.func @transform_4(%arg0: i32) -> (i32, i32) {
    %c0_i32 = arith.constant 0 : i32
    %c0_i32_0 = arith.constant 0 : i32
    %c0_i32_1 = arith.constant 0 : i32
    return %c0_i32, %c0_i32_0 : i32, i32
  }
  func.func @transform_5(%arg0: i32) -> (i32, i32) {
    %c0_i32 = arith.constant 0 : i32
    %c0_i32_0 = arith.constant 0 : i32
    %c0_i32_1 = arith.constant 0 : i32
    return %c0_i32, %c0_i32_0 : i32, i32
  }
  func.func @transform_6(%arg0: i32) -> (i32, i32) {
    %c0_i32 = arith.constant 0 : i32
    %c0_i32_0 = arith.constant 0 : i32
    return %c0_i32, %arg0 : i32, i32
  }
}

module attributes {stable_mosaic.version = 11 : i64} {
  func.func @cph_dl_kernel(%arg0: i32, %arg1: memref<8x32xbf16, #tpu.memory_space<vmem>>, %arg2: memref<32x128xbf16, #tpu.memory_space<vmem>>, %arg3: memref<1x128xf32, #tpu.memory_space<vmem>>, %arg4: memref<128x128xbf16, #tpu.memory_space<vmem>>, %arg5: memref<1x128xf32, #tpu.memory_space<vmem>>, %arg6: memref<1x128xf32, #tpu.memory_space<vmem>>, %arg7: memref<1x8xf32, #tpu.memory_space<vmem>>) attributes {dimension_semantics = [#tpu.dimension_semantics<parallel>], iteration_bounds = array<i64: 1>, scalar_prefetch = 0 : i64, scratch_operands = 0 : i64, tpu.core_type = #tpu.core_type<tc>, window_params = [{transform_indices = @transform_0, window_bounds = array<i64: 8, 32>}, {pipeline_mode = #tpu.pipeline_mode<synchronous>, transform_indices = @transform_1, window_bounds = array<i64: 32, 128>}, {pipeline_mode = #tpu.pipeline_mode<synchronous>, transform_indices = @transform_2, window_bounds = array<i64: 1, 128>}, {pipeline_mode = #tpu.pipeline_mode<synchronous>, transform_indices = @transform_3, window_bounds = array<i64: 128, 128>}, {pipeline_mode = #tpu.pipeline_mode<synchronous>, transform_indices = @transform_4, window_bounds = array<i64: 1, 128>}, {pipeline_mode = #tpu.pipeline_mode<synchronous>, transform_indices = @transform_5, window_bounds = array<i64: 1, 128>}, {transform_indices = @transform_6, window_bounds = array<i64: 1, 8>}]} {
    %c0 = arith.constant 0 : index
    %c0_0 = arith.constant 0 : index
    %0 = vector.load %arg1[%c0, %c0_0] : memref<8x32xbf16, #tpu.memory_space<vmem>>, vector<8x32xbf16>
    %c0_1 = arith.constant 0 : index
    %c0_2 = arith.constant 0 : index
    %1 = vector.load %arg2[%c0_1, %c0_2] : memref<32x128xbf16, #tpu.memory_space<vmem>>, vector<32x128xbf16>
    %cst = arith.constant dense<0.000000e+00> : vector<8x128xf32>
    %2 = tpu.matmul %0, %1, %cst {dimension_numbers = #tpu.dot_dimension_numbers<[1], [0], [0], [1], [0, 0, 1, 1], [], []>} : vector<8x32xbf16>, vector<32x128xbf16>, vector<8x128xf32> -> vector<8x128xf32>
    %c0_3 = arith.constant 0 : index
    %c0_4 = arith.constant 0 : index
    %3 = vector.load %arg3[%c0_3, %c0_4] : memref<1x128xf32, #tpu.memory_space<vmem>>, vector<1x128xf32>
    %4 = vector.broadcast %3 : vector<1x128xf32> to vector<8x128xf32>
    %5 = arith.addf %2, %4 : vector<8x128xf32>
    %cst_5 = arith.constant 0.000000e+00 : f32
    %6 = vector.broadcast %cst_5 : f32 to vector<8x128xf32>
    %7 = arith.maximumf %5, %6 : vector<8x128xf32>
    %8 = arith.truncf %7 : vector<8x128xf32> to vector<8x128xbf16>
    %c0_6 = arith.constant 0 : index
    %c0_7 = arith.constant 0 : index
    %9 = vector.load %arg4[%c0_6, %c0_7] : memref<128x128xbf16, #tpu.memory_space<vmem>>, vector<128x128xbf16>
    %cst_8 = arith.constant dense<0.000000e+00> : vector<8x128xf32>
    %10 = tpu.matmul %8, %9, %cst_8 {dimension_numbers = #tpu.dot_dimension_numbers<[1], [0], [0], [1], [0, 0, 1, 1], [], []>} : vector<8x128xbf16>, vector<128x128xbf16>, vector<8x128xf32> -> vector<8x128xf32>
    %c0_9 = arith.constant 0 : index
    %c0_10 = arith.constant 0 : index
    %11 = vector.load %arg5[%c0_9, %c0_10] : memref<1x128xf32, #tpu.memory_space<vmem>>, vector<1x128xf32>
    %12 = vector.broadcast %11 : vector<1x128xf32> to vector<8x128xf32>
    %13 = arith.addf %10, %12 : vector<8x128xf32>
    %cst_11 = arith.constant 0.000000e+00 : f32
    %14 = vector.broadcast %cst_11 : f32 to vector<8x128xf32>
    %15 = arith.maximumf %13, %14 : vector<8x128xf32>
    %c0_12 = arith.constant 0 : index
    %c0_13 = arith.constant 0 : index
    %16 = vector.load %arg6[%c0_12, %c0_13] : memref<1x128xf32, #tpu.memory_space<vmem>>, vector<1x128xf32>
    %cst_14 = arith.constant dense<0.000000e+00> : vector<1x8xf32>
    %17 = tpu.matmul %16, %15, %cst_14 {dimension_numbers = #tpu.dot_dimension_numbers<[1], [1], [0], [0], [0, 0, 1, 0], [], []>} : vector<1x128xf32>, vector<8x128xf32>, vector<1x8xf32> -> vector<1x8xf32>
    %c0_15 = arith.constant 0 : index
    %c0_16 = arith.constant 0 : index
    %18 = vector.load %arg7[%c0_15, %c0_16] : memref<1x8xf32, #tpu.memory_space<vmem>>, vector<1x8xf32>
    tpu.vector_store %arg7[%c0_15, %c0_16], %17 {strides = array<i32>} : memref<1x8xf32, #tpu.memory_space<vmem>>, vector<1x8xf32>,
    return
  }
  func.func @transform_0(%arg0: i32) -> (i32, i32) {
    %c0_i32 = arith.constant 0 : i32
    %c0_i32_0 = arith.constant 0 : i32
    return %arg0, %c0_i32 : i32, i32
  }
  func.func @transform_1(%arg0: i32) -> (i32, i32) {
    %c0_i32 = arith.constant 0 : i32
    %c0_i32_0 = arith.constant 0 : i32
    %c0_i32_1 = arith.constant 0 : i32
    return %c0_i32, %c0_i32_0 : i32, i32
  }
  func.func @transform_2(%arg0: i32) -> (i32, i32) {
    %c0_i32 = arith.constant 0 : i32
    %c0_i32_0 = arith.constant 0 : i32
    %c0_i32_1 = arith.constant 0 : i32
    return %c0_i32, %c0_i32_0 : i32, i32
  }
  func.func @transform_3(%arg0: i32) -> (i32, i32) {
    %c0_i32 = arith.constant 0 : i32
    %c0_i32_0 = arith.constant 0 : i32
    %c0_i32_1 = arith.constant 0 : i32
    return %c0_i32, %c0_i32_0 : i32, i32
  }
  func.func @transform_4(%arg0: i32) -> (i32, i32) {
    %c0_i32 = arith.constant 0 : i32
    %c0_i32_0 = arith.constant 0 : i32
    %c0_i32_1 = arith.constant 0 : i32
    return %c0_i32, %c0_i32_0 : i32, i32
  }
  func.func @transform_5(%arg0: i32) -> (i32, i32) {
    %c0_i32 = arith.constant 0 : i32
    %c0_i32_0 = arith.constant 0 : i32
    %c0_i32_1 = arith.constant 0 : i32
    return %c0_i32, %c0_i32_0 : i32, i32
  }
  func.func @transform_6(%arg0: i32) -> (i32, i32) {
    %c0_i32 = arith.constant 0 : i32
    %c0_i32_0 = arith.constant 0 : i32
    return %c0_i32, %arg0 : i32, i32
  }
}

</mosaic_0001>

<llo_original>
// kernel: tpu_custom_call.1
$region0: #{tpu_custom_call.1}
  #allocation0 [shape = 'u32[]', space=smem, size = 0x4, offset = 0x4, fixed_abs, tag = 'smem constant byte address 0x4 - core index']
  #allocation1 [shape = 'u32[144,128]{1,0:T(1,128)}', space=vmem, size = 0x12000, scoped, tag = 'internal scratch']
  %s0 = inlined_call_operand.hbm [shape: bf16[8,32], index: 0, kind: input, shape index: {}]
  %s1 = inlined_call_operand.hbm [shape: bf16[32,128], index: 1, kind: input, shape index: {}]
  %s2 = inlined_call_operand.vmem [shape: f32[1,128], index: 2, kind: input, shape index: {}]
  %s3 = inlined_call_operand.hbm [shape: bf16[128,128], index: 3, kind: input, shape index: {}]
  %s4 = inlined_call_operand.vmem [shape: f32[1,128], index: 4, kind: input, shape index: {}]
  %s5 = inlined_call_operand.vmem [shape: f32[1,128], index: 5, kind: input, shape index: {}]
  %s6 = inlined_call_operand.hbm [shape: f32[1,8], index: 6, kind: output, shape index: {}]
  %s7 = sld [smem:[#allocation0]]
  $region46: #{tpu_custom_call.1} parent=0
    _
  %s9 = ssub.s32 1, %s7
  %s10 = scalar_select 0, %s9, %s7
  $region1: #{tpu_custom_call.1} parent=0
    #allocation2 [shape = 'u8[2048]{0}', space=vmem, size = 0x800, scoped, tag = 'input window, operand 0, single buffered']
    #allocation3 [shape = 's32[1]{0}', space=sflag, size = 0x4, scoped, tag = 'scoped memory for tpu_custom_call.1']
    #allocation4 [shape = 's32[1]{0}', space=sflag, size = 0x4, scoped, tag = 'scoped memory for tpu_custom_call.1']
    #allocation5 [shape = 'u8[8192]{0}', space=vmem, size = 0x2000, scoped, tag = 'input window, operand 1, single buffered']
    #allocation6 [shape = 's32[1]{0}', space=sflag, size = 0x4, scoped, tag = 'scoped memory for tpu_custom_call.1']
    #allocation7 [shape = 'u8[32768]{0}', space=vmem, size = 0x8000, scoped, tag = 'input window, operand 3, single buffered']
    #allocation8 [shape = 'u8[512]{0}', space=vmem, size = 0x400, scoped, tag = 'output window, operand 0, single buffered']
    %11 = vsyncpa [#allocation3], 0
    %12 = vsyncpa [#allocation6], 0
    %13 = vsyncpa [#allocation4], 0
    // Predicated region
    $region2: #{tpu_custom_call.1} parent=1 // pred_check
      _
    $region3: #{tpu_custom_call.1} parent=1 // pred_check_branch
      %15 = sbr.rel (0) target = $region5
    $region4: #{tpu_custom_call.1} parent=1 // pred_region
      %s17 = ssub.s32 64, 64
      %18 = vsyncadd [#allocation3], %s17
      %s20 = sshll.u32 [#allocation2], 4
      %s21 = int_to_ptr.vmem [resolvable:$true] %s20
      %23 = dma.hbm_to_vmem [thread:$0]  %s0, 64, %s21, [#allocation3]
    $region5: #{tpu_custom_call.1} parent=1 // pred_fallthru
      _
    // Predicated region
    $region6: #{tpu_custom_call.1} parent=1 // pred_check
      _
    $region7: #{tpu_custom_call.1} parent=1 // pred_check_branch
      %25 = sbr.rel (0) target = $region9
    $region8: #{tpu_custom_call.1} parent=1 // pred_region
      %s27 = ssub.s32 256, 256
      %28 = vsyncadd [#allocation6], %s27
      %s29 = sshll.u32 [#allocation5], 4
      %s30 = int_to_ptr.vmem [resolvable:$true] %s29
      %35 = dma.hbm_to_vmem [thread:$0]  %s1, 256, %s30, [#allocation6], 64, 64, 4
    $region9: #{tpu_custom_call.1} parent=1 // pred_fallthru
      _
    // Predicated region
    $region10: #{tpu_custom_call.1} parent=1 // pred_check
      _
    $region11: #{tpu_custom_call.1} parent=1 // pred_check_branch
      %37 = sbr.rel (0) target = $region13
    $region12: #{tpu_custom_call.1} parent=1 // pred_region
      _
    $region13: #{tpu_custom_call.1} parent=1 // pred_fallthru
      _
    // Predicated region
    $region14: #{tpu_custom_call.1} parent=1 // pred_check
      _
    $region15: #{tpu_custom_call.1} parent=1 // pred_check_branch
      %39 = sbr.rel (0) target = $region17
    $region16: #{tpu_custom_call.1} parent=1 // pred_region
      %s41 = ssub.s32 1024, 1024
      %42 = vsyncadd [#allocation6], %s41
      %s43 = sshll.u32 [#allocation7], 4
      %s44 = int_to_ptr.vmem [resolvable:$true] %s43
      %49 = dma.hbm_to_vmem [thread:$0]  %s3, 1024, %s44, [#allocation6], 64, 64, 4
    $region17: #{tpu_custom_call.1} parent=1 // pred_fallthru
      _
    // Predicated region
    $region18: #{tpu_custom_call.1} parent=1 // pred_check
      _
    $region19: #{tpu_custom_call.1} parent=1 // pred_check_branch
      %51 = sbr.rel (0) target = $region21
    $region20: #{tpu_custom_call.1} parent=1 // pred_region
      _
    $region21: #{tpu_custom_call.1} parent=1 // pred_fallthru
      _
    // Predicated region
    $region22: #{tpu_custom_call.1} parent=1 // pred_check
      _
    $region23: #{tpu_custom_call.1} parent=1 // pred_check_branch
      %53 = sbr.rel (0) target = $region25
    $region24: #{tpu_custom_call.1} parent=1 // pred_region
      _
    $region25: #{tpu_custom_call.1} parent=1 // pred_fallthru
      _
    // Predicated region
    $region26: #{tpu_custom_call.1} parent=1 // pred_check
      _
    $region27: #{tpu_custom_call.1} parent=1 // pred_check_branch
      %55 = sbr.rel (0) target = $region29
    $region28: #{tpu_custom_call.1} parent=1 // pred_region
      %56 = dma.done [#allocation3], 64
    $region29: #{tpu_custom_call.1} parent=1 // pred_fallthru
      _
    // Predicated region
    $region30: #{tpu_custom_call.1} parent=1 // pred_check
      _
    $region31: #{tpu_custom_call.1} parent=1 // pred_check_branch
      %58 = sbr.rel (0) target = $region33
    $region32: #{tpu_custom_call.1} parent=1 // pred_region
      %59 = dma.done [#allocation6], 256
    $region33: #{tpu_custom_call.1} parent=1 // pred_fallthru
      _
    // Predicated region
    $region34: #{tpu_custom_call.1} parent=1 // pred_check
      _
    $region35: #{tpu_custom_call.1} parent=1 // pred_check_branch
      %61 = sbr.rel (0) target = $region37
    $region36: #{tpu_custom_call.1} parent=1 // pred_region
      %62 = dma.done [#allocation6], 1024
    $region37: #{tpu_custom_call.1} parent=1 // pred_fallthru
      _
    %v64 = vld [vmem:[#allocation2] sm:$0xf]
    %v65 = vld [vmem:[#allocation5] sm:$0xf]
    %v66 = vld [vmem:[#allocation5 + $0x4] sm:$0xf]
    %v67 = vld [vmem:[#allocation5 + $0x8] sm:$0xf]
    %v68 = vld [vmem:[#allocation5 + $0xc] sm:$0xf]
    %v69 = vld [vmem:[%s2] sm:$0x1]
    %v71 = vlaneseq
    %v72 = vshrl.u32 %v71, 7
    %v73 = vsub.s32 0, %v72
    %v74 = vrot.slane %v69, %v73
    %v80 = vunpack.c.l.b16 %v65
    %v81 = vunpack.c.l.b16 %v66
    %v82 = vunpack.c.l.b16 %v67
    %v83 = vunpack.c.l.b16 %v68
    %v84 = vpack.c.b16 %v81, %v80
    %v85 = vpack.c.b16 %v83, %v82
    %vm88 = vcmask 261120
    %v90 = vsel %vm88, %v64, 0
    %92 = vmatprep.subr.bf16.mxu0 0
    %93 = vmatpush1.bf16.msra.mxu0 %v84
    %94 = vmatprep.subr.bf16.mxu0 0
    %95 = vmatpush1.bf16.msra.mxu0 %v85
    %96 = vmatprep.subr.bf16.mxu0 0
    %97 = vmatpush1.bf16.msra.mxu0 0
    %98 = vmatprep.subr.bf16.mxu0 0
    %99 = vmatpush1.bf16.msra.mxu0 0
    %100 = vmatprep.subr.bf16.mxu0 0
    %101 = vmatpush1.bf16.msra.mxu0 0
    %102 = vmatprep.subr.bf16.mxu0 0
    %103 = vmatpush1.bf16.msra.mxu0 0
    %104 = vmatprep.subr.bf16.mxu0 0
    %105 = vmatpush1.bf16.msra.mxu0 0
    %106 = vmatprep.subr.bf16.mxu0 0
    %107 = vmatpush1.bf16.msra.mxu0 0
    %108 = vmatprep.subr.bf16.mxu0 0
    %109 = vmatpush1.bf16.msra.mxu0 0
    %110 = vmatprep.subr.bf16.mxu0 0
    %111 = vmatpush1.bf16.msra.mxu0 0
    %112 = vmatprep.subr.bf16.mxu0 0
    %113 = vmatpush1.bf16.msra.mxu0 0
    %114 = vmatprep.subr.bf16.mxu0 0
    %115 = vmatpush1.bf16.msra.mxu0 0
    %116 = vmatprep.subr.bf16.mxu0 0
    %117 = vmatpush1.bf16.msra.mxu0 0
    %118 = vmatprep.subr.bf16.mxu0 0
    %119 = vmatpush1.bf16.msra.mxu0 0
    %120 = vmatprep.subr.bf16.mxu0 0
    %121 = vmatpush1.bf16.msra.mxu0 0
    %122 = vmatprep.subr.bf16.mxu0 0
    %123 = vmatpush1.bf16.msra.mxu0 0
    %124 = vmatprep.mubr.bf16.mxu0 0
    %125 = vmatmul.mubr.bf16.gmra.mrb[0].mxu0 %v90
    %v126 = vpop.f32.mrb[0].mxu0
    %v127 = vadd.f32 %v74, %v126
    %v128 = vpop.f32.mrb[0].mxu0
    %v129 = vpop.f32.mrb[0].mxu0
    %v130 = vpop.f32.mrb[0].mxu0
    %131 = vdwg.mxu0
    %v132 = vmax.f32 %v127, 0.0
    %v133 = vpack.c.bf16 %v132, %v132
    %v134 = vld [vmem:[#allocation7] sm:$0xf]
    %v135 = vld [vmem:[#allocation7 + $0x4] sm:$0xf]
    %v136 = vld [vmem:[#allocation7 + $0x8] sm:$0xf]
    %v137 = vld [vmem:[#allocation7 + $0xc] sm:$0xf]
    %v138 = vld [vmem:[#allocation7 + $0x10] sm:$0xf]
    %v139 = vld [vmem:[#allocation7 + $0x14] sm:$0xf]
    %v140 = vld [vmem:[#allocation7 + $0x18] sm:$0xf]
    %v141 = vld [vmem:[#allocation7 + $0x1c] sm:$0xf]
    %v142 = vld [vmem:[#allocation7 + $0x20] sm:$0xf]
    %v143 = vld [vmem:[#allocation7 + $0x24] sm:$0xf]
    %v144 = vld [vmem:[#allocation7 + $0x28] sm:$0xf]
    %v145 = vld [vmem:[#allocation7 + $0x2c] sm:$0xf]
    %v146 = vld [vmem:[#allocation7 + $0x30] sm:$0xf]
    %v147 = vld [vmem:[#allocation7 + $0x34] sm:$0xf]
    %v148 = vld [vmem:[#allocation7 + $0x38] sm:$0xf]
    %v149 = vld [vmem:[#allocation7 + $0x3c] sm:$0xf]
    %v150 = vld [vmem:[%s4] sm:$0x1]
    %v152 = vlaneseq
    %v153 = vshrl.u32 %v152, 7
    %v154 = vsub.s32 0, %v153
    %v155 = vrot.slane %v150, %v154
    %v173 = vunpack.c.l.b16 %v134
    %v174 = vunpack.c.l.b16 %v135
    %v175 = vunpack.c.l.b16 %v136
    %v176 = vunpack.c.l.b16 %v137
    %v177 = vunpack.c.l.b16 %v138
    %v178 = vunpack.c.l.b16 %v139
    %v179 = vunpack.c.l.b16 %v140
    %v180 = vunpack.c.l.b16 %v141
    %v181 = vunpack.c.l.b16 %v142
    %v182 = vunpack.c.l.b16 %v143
    %v183 = vunpack.c.l.b16 %v144
    %v184 = vunpack.c.l.b16 %v145
    %v185 = vunpack.c.l.b16 %v146
    %v186 = vunpack.c.l.b16 %v147
    %v187 = vunpack.c.l.b16 %v148
    %v188 = vunpack.c.l.b16 %v149
    %v189 = vpack.c.b16 %v174, %v173
    %v190 = vpack.c.b16 %v176, %v175
    %v191 = vpack.c.b16 %v178, %v177
    %v192 = vpack.c.b16 %v180, %v179
    %v193 = vpack.c.b16 %v182, %v181
    %v194 = vpack.c.b16 %v184, %v183
    %v195 = vpack.c.b16 %v186, %v185
    %v196 = vpack.c.b16 %v188, %v187
    %205 = vmatprep.subr.bf16.mxu0 0
    %206 = vmatpush1.bf16.msra.mxu0 %v189
    %207 = vmatprep.subr.bf16.mxu0 0
    %208 = vmatpush1.bf16.msra.mxu0 %v190
    %209 = vmatprep.subr.bf16.mxu0 0
    %210 = vmatpush1.bf16.msra.mxu0 %v191
    %211 = vmatprep.subr.bf16.mxu0 0
    %212 = vmatpush1.bf16.msra.mxu0 %v192
    %213 = vmatprep.subr.bf16.mxu0 0
    %214 = vmatpush1.bf16.msra.mxu0 %v193
    %215 = vmatprep.subr.bf16.mxu0 0
    %216 = vmatpush1.bf16.msra.mxu0 %v194
    %217 = vmatprep.subr.bf16.mxu0 0
    %218 = vmatpush1.bf16.msra.mxu0 %v195
    %219 = vmatprep.subr.bf16.mxu0 0
    %220 = vmatpush1.bf16.msra.mxu0 %v196
    %221 = vmatprep.subr.bf16.mxu0 0
    %222 = vmatpush1.bf16.msra.mxu0 0
    %223 = vmatprep.subr.bf16.mxu0 0
    %224 = vmatpush1.bf16.msra.mxu0 0
    %225 = vmatprep.subr.bf16.mxu0 0
    %226 = vmatpush1.bf16.msra.mxu0 0
    %227 = vmatprep.subr.bf16.mxu0 0
    %228 = vmatpush1.bf16.msra.mxu0 0
    %229 = vmatprep.subr.bf16.mxu0 0
    %230 = vmatpush1.bf16.msra.mxu0 0
    %231 = vmatprep.subr.bf16.mxu0 0
    %232 = vmatpush1.bf16.msra.mxu0 0
    %233 = vmatprep.subr.bf16.mxu0 0
    %234 = vmatpush1.bf16.msra.mxu0 0
    %235 = vmatprep.subr.bf16.mxu0 0
    %236 = vmatpush1.bf16.msra.mxu0 0
    %237 = vmatprep.mubr.bf16.mxu0 0
    %238 = vmatmul.mubr.bf16.gmra.mrb[0].mxu0 %v133
    %v239 = vpop.f32.mrb[0].mxu0
    %v240 = vadd.f32 %v155, %v239
    %v241 = vpop.f32.mrb[0].mxu0
    %v242 = vpop.f32.mrb[0].mxu0
    %v243 = vpop.f32.mrb[0].mxu0
    %244 = vdwg.mxu0
    %v245 = vmax.f32 %v240, 0.0
    %v246 = vld [vmem:[%s5] sm:$0x1]
    %247 = vmatprep.subr.mxu0 0.0
    %248 = vmatpush1.xpose.msra.mxu0 %v245
    %249 = vmatprep.subr.mxu0 0.0
    %250 = vmatpush1.xpose.msra.mxu0 0.0
    %251 = vmatprep.subr.mxu0 0.0
    %252 = vmatpush1.xpose.msra.mxu0 0.0
    %253 = vmatprep.subr.mxu0 0.0
    %254 = vmatpush1.xpose.msra.mxu0 0.0
    %255 = vmatprep.subr.mxu0 0.0
    %256 = vmatpush1.xpose.msra.mxu0 0.0
    %257 = vmatprep.subr.mxu0 0.0
    %258 = vmatpush1.xpose.msra.mxu0 0.0
    %259 = vmatprep.subr.mxu0 0.0
    %260 = vmatpush1.xpose.msra.mxu0 0.0
    %261 = vmatprep.subr.mxu0 0.0
    %262 = vmatpush1.xpose.msra.mxu0 0.0
    %263 = vmatprep.subr.mxu0 0.0
    %264 = vmatpush1.xpose.msra.mxu0 0.0
    %265 = vmatprep.subr.mxu0 0.0
    %266 = vmatpush1.xpose.msra.mxu0 0.0
    %267 = vmatprep.subr.mxu0 0.0
    %268 = vmatpush1.xpose.msra.mxu0 0.0
    %269 = vmatprep.subr.mxu0 0.0
    %270 = vmatpush1.xpose.msra.mxu0 0.0
    %271 = vmatprep.subr.mxu0 0.0
    %272 = vmatpush1.xpose.msra.mxu0 0.0
    %273 = vmatprep.subr.mxu0 0.0
    %274 = vmatpush1.xpose.msra.mxu0 0.0
    %275 = vmatprep.subr.mxu0 0.0
    %276 = vmatpush1.xpose.msra.mxu0 0.0
    %277 = vmatprep.subr.mxu0 0.0
    %278 = vmatpush1.xpose.msra.mxu0 0.0
    %279 = vmatprep.subr.mxu0 0.0
    %280 = vmatpush1.xpose.msra.mxu0 0.0
    %281 = vmatprep.subr.mxu0 0.0
    %282 = vmatpush1.xpose.msra.mxu0 0.0
    %283 = vmatprep.subr.mxu0 0.0
    %284 = vmatpush1.xpose.msra.mxu0 0.0
    %285 = vmatprep.subr.mxu0 0.0
    %286 = vmatpush1.xpose.msra.mxu0 0.0
    %287 = vmatprep.subr.mxu0 0.0
    %288 = vmatpush1.xpose.msra.mxu0 0.0
    %289 = vmatprep.subr.mxu0 0.0
    %290 = vmatpush1.xpose.msra.mxu0 0.0
    %291 = vmatprep.subr.mxu0 0.0
    %292 = vmatpush1.xpose.msra.mxu0 0.0
    %293 = vmatprep.subr.mxu0 0.0
    %294 = vmatpush1.xpose.msra.mxu0 0.0
    %295 = vmatprep.subr.mxu0 0.0
    %296 = vmatpush1.xpose.msra.mxu0 0.0
    %297 = vmatprep.subr.mxu0 0.0
    %298 = vmatpush1.xpose.msra.mxu0 0.0
    %299 = vmatprep.subr.mxu0 0.0
    %300 = vmatpush1.xpose.msra.mxu0 0.0
    %301 = vmatprep.subr.mxu0 0.0
    %302 = vmatpush1.xpose.msra.mxu0 0.0
    %303 = vmatprep.subr.mxu0 0.0
    %304 = vmatpush1.xpose.msra.mxu0 0.0
    %305 = vmatprep.subr.mxu0 0.0
    %306 = vmatpush1.xpose.msra.mxu0 0.0
    %307 = vmatprep.subr.mxu0 0.0
    %308 = vmatpush1.xpose.msra.mxu0 0.0
    %309 = vmatprep.subr.mxu0 0.0
    %310 = vmatpush1.xpose.msra.mxu0 0.0
    %311 = vmatprep.mubr.f32.mxu0 0.0
    %312 = vmatmul.mubr.f32.gmra.mrb[0].mxu0 %v246
    %v313 = vpop.f32.mrb[0].mxu0
    %v314 = vadd.f32 0.0, %v313
    %v315 = vpop.f32.mrb[0].mxu0
    %316 = vdwg.mxu0
    %vm317 = vcmask 57344
    %318 = vst.msk [vmem:[#allocation8] sm:$0x1] %vm317, %v314
    // Predicated region
    $region38: #{tpu_custom_call.1} parent=1 // pred_check
      _
    $region39: #{tpu_custom_call.1} parent=1 // pred_check_branch
      %320 = sbr.rel (0) target = $region41
    $region40: #{tpu_custom_call.1} parent=1 // pred_region
      %s322 = ssub.s32 16, 16
      %323 = vsyncadd [#allocation4], %s322
      %s325 = sshll.u32 [#allocation8], 4
      %s326 = int_to_ptr.vmem [resolvable:$true] %s325
      %328 = dma.vmem_to_hbm [thread:$0]  %s326, 16, %s6, [#allocation4]
    $region41: #{tpu_custom_call.1} parent=1 // pred_fallthru
      _
    // Predicated region
    $region42: #{tpu_custom_call.1} parent=1 // pred_check
      _
    $region43: #{tpu_custom_call.1} parent=1 // pred_check_branch
      %330 = sbr.rel (0) target = $region45
    $region44: #{tpu_custom_call.1} parent=1 // pred_region
      %331 = dma.done [#allocation4], 16
    $region45: #{tpu_custom_call.1} parent=1 // pred_fallthru
      _
    %332 = vsyncpa [#allocation3], 1
    %333 = vsyncpa [#allocation6], 1
    %334 = vsyncpa [#allocation4], 1

// kernel: tpu_custom_call.1
$region0: #{tpu_custom_call.1}
  #allocation0 [shape = 'u32[]', space=smem, size = 0x4, offset = 0x4, fixed_abs, tag = 'smem constant byte address 0x4 - core index']
  #allocation1 [shape = 'u32[144,128]{1,0:T(1,128)}', space=vmem, size = 0x12000, scoped, tag = 'internal scratch']
  %s0 = inlined_call_operand.hbm [shape: bf16[8,32], index: 0, kind: input, shape index: {}]
  %s1 = inlined_call_operand.hbm [shape: bf16[32,128], index: 1, kind: input, shape index: {}]
  %s2 = inlined_call_operand.vmem [shape: f32[1,128], index: 2, kind: input, shape index: {}]
  %s3 = inlined_call_operand.hbm [shape: bf16[128,128], index: 3, kind: input, shape index: {}]
  %s4 = inlined_call_operand.vmem [shape: f32[1,128], index: 4, kind: input, shape index: {}]
  %s5 = inlined_call_operand.vmem [shape: f32[1,128], index: 5, kind: input, shape index: {}]
  %s6 = inlined_call_operand.hbm [shape: f32[1,8], index: 6, kind: output, shape index: {}]
  %s7 = sld [smem:[#allocation0]]
  $region46: #{tpu_custom_call.1} parent=0
    _
  %s9 = ssub.s32 1, %s7
  %s10 = scalar_select 0, %s9, %s7
  $region1: #{tpu_custom_call.1} parent=0
    #allocation2 [shape = 'u8[2048]{0}', space=vmem, size = 0x800, scoped, tag = 'input window, operand 0, single buffered']
    #allocation3 [shape = 's32[1]{0}', space=sflag, size = 0x4, scoped, tag = 'scoped memory for tpu_custom_call.1']
    #allocation4 [shape = 's32[1]{0}', space=sflag, size = 0x4, scoped, tag = 'scoped memory for tpu_custom_call.1']
    #allocation5 [shape = 'u8[8192]{0}', space=vmem, size = 0x2000, scoped, tag = 'input window, operand 1, single buffered']
    #allocation6 [shape = 's32[1]{0}', space=sflag, size = 0x4, scoped, tag = 'scoped memory for tpu_custom_call.1']
    #allocation7 [shape = 'u8[32768]{0}', space=vmem, size = 0x8000, scoped, tag = 'input window, operand 3, single buffered']
    #allocation8 [shape = 'u8[512]{0}', space=vmem, size = 0x400, scoped, tag = 'output window, operand 0, single buffered']
    %11 = vsyncpa [#allocation3], 0
    %12 = vsyncpa [#allocation6], 0
    %13 = vsyncpa [#allocation4], 0
    // Predicated region
    $region2: #{tpu_custom_call.1} parent=1 // pred_check
      _
    $region3: #{tpu_custom_call.1} parent=1 // pred_check_branch
      %15 = sbr.rel (0) target = $region5
    $region4: #{tpu_custom_call.1} parent=1 // pred_region
      %s17 = ssub.s32 64, 64
      %18 = vsyncadd [#allocation3], %s17
      %s20 = sshll.u32 [#allocation2], 4
      %s21 = int_to_ptr.vmem [resolvable:$true] %s20
      %23 = dma.hbm_to_vmem [thread:$0]  %s0, 64, %s21, [#allocation3]
    $region5: #{tpu_custom_call.1} parent=1 // pred_fallthru
      _
    // Predicated region
    $region6: #{tpu_custom_call.1} parent=1 // pred_check
      _
    $region7: #{tpu_custom_call.1} parent=1 // pred_check_branch
      %25 = sbr.rel (0) target = $region9
    $region8: #{tpu_custom_call.1} parent=1 // pred_region
      %s27 = ssub.s32 256, 256
      %28 = vsyncadd [#allocation6], %s27
      %s29 = sshll.u32 [#allocation5], 4
      %s30 = int_to_ptr.vmem [resolvable:$true] %s29
      %35 = dma.hbm_to_vmem [thread:$0]  %s1, 256, %s30, [#allocation6], 64, 64, 4
    $region9: #{tpu_custom_call.1} parent=1 // pred_fallthru
      _
    // Predicated region
    $region10: #{tpu_custom_call.1} parent=1 // pred_check
      _
    $region11: #{tpu_custom_call.1} parent=1 // pred_check_branch
      %37 = sbr.rel (0) target = $region13
    $region12: #{tpu_custom_call.1} parent=1 // pred_region
      _
    $region13: #{tpu_custom_call.1} parent=1 // pred_fallthru
      _
    // Predicated region
    $region14: #{tpu_custom_call.1} parent=1 // pred_check
      _
    $region15: #{tpu_custom_call.1} parent=1 // pred_check_branch
      %39 = sbr.rel (0) target = $region17
    $region16: #{tpu_custom_call.1} parent=1 // pred_region
      %s41 = ssub.s32 1024, 1024
      %42 = vsyncadd [#allocation6], %s41
      %s43 = sshll.u32 [#allocation7], 4
      %s44 = int_to_ptr.vmem [resolvable:$true] %s43
      %49 = dma.hbm_to_vmem [thread:$0]  %s3, 1024, %s44, [#allocation6], 64, 64, 4
    $region17: #{tpu_custom_call.1} parent=1 // pred_fallthru
      _
    // Predicated region
    $region18: #{tpu_custom_call.1} parent=1 // pred_check
      _
    $region19: #{tpu_custom_call.1} parent=1 // pred_check_branch
      %51 = sbr.rel (0) target = $region21
    $region20: #{tpu_custom_call.1} parent=1 // pred_region
      _
    $region21: #{tpu_custom_call.1} parent=1 // pred_fallthru
      _
    // Predicated region
    $region22: #{tpu_custom_call.1} parent=1 // pred_check
      _
    $region23: #{tpu_custom_call.1} parent=1 // pred_check_branch
      %53 = sbr.rel (0) target = $region25
    $region24: #{tpu_custom_call.1} parent=1 // pred_region
      _
    $region25: #{tpu_custom_call.1} parent=1 // pred_fallthru
      _
    // Predicated region
    $region26: #{tpu_custom_call.1} parent=1 // pred_check
      _
    $region27: #{tpu_custom_call.1} parent=1 // pred_check_branch
      %55 = sbr.rel (0) target = $region29
    $region28: #{tpu_custom_call.1} parent=1 // pred_region
      %56 = dma.done [#allocation3], 64
    $region29: #{tpu_custom_call.1} parent=1 // pred_fallthru
      _
    // Predicated region
    $region30: #{tpu_custom_call.1} parent=1 // pred_check
      _
    $region31: #{tpu_custom_call.1} parent=1 // pred_check_branch
      %58 = sbr.rel (0) target = $region33
    $region32: #{tpu_custom_call.1} parent=1 // pred_region
      %59 = dma.done [#allocation6], 256
    $region33: #{tpu_custom_call.1} parent=1 // pred_fallthru
      _
    // Predicated region
    $region34: #{tpu_custom_call.1} parent=1 // pred_check
      _
    $region35: #{tpu_custom_call.1} parent=1 // pred_check_branch
      %61 = sbr.rel (0) target = $region37
    $region36: #{tpu_custom_call.1} parent=1 // pred_region
      %62 = dma.done [#allocation6], 1024
    $region37: #{tpu_custom_call.1} parent=1 // pred_fallthru
      _
    %v64 = vld [vmem:[#allocation2] sm:$0xf]
    %v65 = vld [vmem:[#allocation5] sm:$0xf]
    %v66 = vld [vmem:[#allocation5 + $0x4] sm:$0xf]
    %v67 = vld [vmem:[#allocation5 + $0x8] sm:$0xf]
    %v68 = vld [vmem:[#allocation5 + $0xc] sm:$0xf]
    %v69 = vld [vmem:[%s2] sm:$0x1]
    %v71 = vlaneseq
    %v72 = vshrl.u32 %v71, 7
    %v73 = vsub.s32 0, %v72
    %v74 = vrot.slane %v69, %v73
    %v80 = vunpack.c.l.b16 %v65
    %v81 = vunpack.c.l.b16 %v66
    %v82 = vunpack.c.l.b16 %v67
    %v83 = vunpack.c.l.b16 %v68
    %v84 = vpack.c.b16 %v81, %v80
    %v85 = vpack.c.b16 %v83, %v82
    %vm88 = vcmask 261120
    %v90 = vsel %vm88, %v64, 0
    %92 = vmatprep.subr.bf16.mxu0 0
    %93 = vmatpush1.bf16.msra.mxu0 %v84
    %94 = vmatprep.subr.bf16.mxu0 0
    %95 = vmatpush1.bf16.msra.mxu0 %v85
    %96 = vmatprep.subr.bf16.mxu0 0
    %97 = vmatpush1.bf16.msra.mxu0 0
    %98 = vmatprep.subr.bf16.mxu0 0
    %99 = vmatpush1.bf16.msra.mxu0 0
    %100 = vmatprep.subr.bf16.mxu0 0
    %101 = vmatpush1.bf16.msra.mxu0 0
    %102 = vmatprep.subr.bf16.mxu0 0
    %103 = vmatpush1.bf16.msra.mxu0 0
    %104 = vmatprep.subr.bf16.mxu0 0
    %105 = vmatpush1.bf16.msra.mxu0 0
    %106 = vmatprep.subr.bf16.mxu0 0
    %107 = vmatpush1.bf16.msra.mxu0 0
    %108 = vmatprep.subr.bf16.mxu0 0
    %109 = vmatpush1.bf16.msra.mxu0 0
    %110 = vmatprep.subr.bf16.mxu0 0
    %111 = vmatpush1.bf16.msra.mxu0 0
    %112 = vmatprep.subr.bf16.mxu0 0
    %113 = vmatpush1.bf16.msra.mxu0 0
    %114 = vmatprep.subr.bf16.mxu0 0
    %115 = vmatpush1.bf16.msra.mxu0 0
    %116 = vmatprep.subr.bf16.mxu0 0
    %117 = vmatpush1.bf16.msra.mxu0 0
    %118 = vmatprep.subr.bf16.mxu0 0
    %119 = vmatpush1.bf16.msra.mxu0 0
    %120 = vmatprep.subr.bf16.mxu0 0
    %121 = vmatpush1.bf16.msra.mxu0 0
    %122 = vmatprep.subr.bf16.mxu0 0
    %123 = vmatpush1.bf16.msra.mxu0 0
    %124 = vmatprep.mubr.bf16.mxu0 0
    %125 = vmatmul.mubr.bf16.gmra.mrb[0].mxu0 %v90
    %v126 = vpop.f32.mrb[0].mxu0
    %v127 = vadd.f32 %v74, %v126
    %v128 = vpop.f32.mrb[0].mxu0
    %v129 = vpop.f32.mrb[0].mxu0
    %v130 = vpop.f32.mrb[0].mxu0
    %131 = vdwg.mxu0
    %v132 = vmax.f32 %v127, 0.0
    %v133 = vpack.c.bf16 %v132, %v132
    %v134 = vld [vmem:[#allocation7] sm:$0xf]
    %v135 = vld [vmem:[#allocation7 + $0x4] sm:$0xf]
    %v136 = vld [vmem:[#allocation7 + $0x8] sm:$0xf]
    %v137 = vld [vmem:[#allocation7 + $0xc] sm:$0xf]
    %v138 = vld [vmem:[#allocation7 + $0x10] sm:$0xf]
    %v139 = vld [vmem:[#allocation7 + $0x14] sm:$0xf]
    %v140 = vld [vmem:[#allocation7 + $0x18] sm:$0xf]
    %v141 = vld [vmem:[#allocation7 + $0x1c] sm:$0xf]
    %v142 = vld [vmem:[#allocation7 + $0x20] sm:$0xf]
    %v143 = vld [vmem:[#allocation7 + $0x24] sm:$0xf]
    %v144 = vld [vmem:[#allocation7 + $0x28] sm:$0xf]
    %v145 = vld [vmem:[#allocation7 + $0x2c] sm:$0xf]
    %v146 = vld [vmem:[#allocation7 + $0x30] sm:$0xf]
    %v147 = vld [vmem:[#allocation7 + $0x34] sm:$0xf]
    %v148 = vld [vmem:[#allocation7 + $0x38] sm:$0xf]
    %v149 = vld [vmem:[#allocation7 + $0x3c] sm:$0xf]
    %v150 = vld [vmem:[%s4] sm:$0x1]
    %v152 = vlaneseq
    %v153 = vshrl.u32 %v152, 7
    %v154 = vsub.s32 0, %v153
    %v155 = vrot.slane %v150, %v154
    %v173 = vunpack.c.l.b16 %v134
    %v174 = vunpack.c.l.b16 %v135
    %v175 = vunpack.c.l.b16 %v136
    %v176 = vunpack.c.l.b16 %v137
    %v177 = vunpack.c.l.b16 %v138
    %v178 = vunpack.c.l.b16 %v139
    %v179 = vunpack.c.l.b16 %v140
    %v180 = vunpack.c.l.b16 %v141
    %v181 = vunpack.c.l.b16 %v142
    %v182 = vunpack.c.l.b16 %v143
    %v183 = vunpack.c.l.b16 %v144
    %v184 = vunpack.c.l.b16 %v145
    %v185 = vunpack.c.l.b16 %v146
    %v186 = vunpack.c.l.b16 %v147
    %v187 = vunpack.c.l.b16 %v148
    %v188 = vunpack.c.l.b16 %v149
    %v189 = vpack.c.b16 %v174, %v173
    %v190 = vpack.c.b16 %v176, %v175
    %v191 = vpack.c.b16 %v178, %v177
    %v192 = vpack.c.b16 %v180, %v179
    %v193 = vpack.c.b16 %v182, %v181
    %v194 = vpack.c.b16 %v184, %v183
    %v195 = vpack.c.b16 %v186, %v185
    %v196 = vpack.c.b16 %v188, %v187
    %205 = vmatprep.subr.bf16.mxu0 0
    %206 = vmatpush1.bf16.msra.mxu0 %v189
    %207 = vmatprep.subr.bf16.mxu0 0
    %208 = vmatpush1.bf16.msra.mxu0 %v190
    %209 = vmatprep.subr.bf16.mxu0 0
    %210 = vmatpush1.bf16.msra.mxu0 %v191
    %211 = vmatprep.subr.bf16.mxu0 0
    %212 = vmatpush1.bf16.msra.mxu0 %v192
    %213 = vmatprep.subr.bf16.mxu0 0
    %214 = vmatpush1.bf16.msra.mxu0 %v193
    %215 = vmatprep.subr.bf16.mxu0 0
    %216 = vmatpush1.bf16.msra.mxu0 %v194
    %217 = vmatprep.subr.bf16.mxu0 0
    %218 = vmatpush1.bf16.msra.mxu0 %v195
    %219 = vmatprep.subr.bf16.mxu0 0
    %220 = vmatpush1.bf16.msra.mxu0 %v196
    %221 = vmatprep.subr.bf16.mxu0 0
    %222 = vmatpush1.bf16.msra.mxu0 0
    %223 = vmatprep.subr.bf16.mxu0 0
    %224 = vmatpush1.bf16.msra.mxu0 0
    %225 = vmatprep.subr.bf16.mxu0 0
    %226 = vmatpush1.bf16.msra.mxu0 0
    %227 = vmatprep.subr.bf16.mxu0 0
    %228 = vmatpush1.bf16.msra.mxu0 0
    %229 = vmatprep.subr.bf16.mxu0 0
    %230 = vmatpush1.bf16.msra.mxu0 0
    %231 = vmatprep.subr.bf16.mxu0 0
    %232 = vmatpush1.bf16.msra.mxu0 0
    %233 = vmatprep.subr.bf16.mxu0 0
    %234 = vmatpush1.bf16.msra.mxu0 0
    %235 = vmatprep.subr.bf16.mxu0 0
    %236 = vmatpush1.bf16.msra.mxu0 0
    %237 = vmatprep.mubr.bf16.mxu0 0
    %238 = vmatmul.mubr.bf16.gmra.mrb[0].mxu0 %v133
    %v239 = vpop.f32.mrb[0].mxu0
    %v240 = vadd.f32 %v155, %v239
    %v241 = vpop.f32.mrb[0].mxu0
    %v242 = vpop.f32.mrb[0].mxu0
    %v243 = vpop.f32.mrb[0].mxu0
    %244 = vdwg.mxu0
    %v245 = vmax.f32 %v240, 0.0
    %v246 = vld [vmem:[%s5] sm:$0x1]
    %247 = vmatprep.subr.mxu0 0.0
    %248 = vmatpush1.xpose.msra.mxu0 %v245
    %249 = vmatprep.subr.mxu0 0.0
    %250 = vmatpush1.xpose.msra.mxu0 0.0
    %251 = vmatprep.subr.mxu0 0.0
    %252 = vmatpush1.xpose.msra.mxu0 0.0
    %253 = vmatprep.subr.mxu0 0.0
    %254 = vmatpush1.xpose.msra.mxu0 0.0
    %255 = vmatprep.subr.mxu0 0.0
    %256 = vmatpush1.xpose.msra.mxu0 0.0
    %257 = vmatprep.subr.mxu0 0.0
    %258 = vmatpush1.xpose.msra.mxu0 0.0
    %259 = vmatprep.subr.mxu0 0.0
    %260 = vmatpush1.xpose.msra.mxu0 0.0
    %261 = vmatprep.subr.mxu0 0.0
    %262 = vmatpush1.xpose.msra.mxu0 0.0
    %263 = vmatprep.subr.mxu0 0.0
    %264 = vmatpush1.xpose.msra.mxu0 0.0
    %265 = vmatprep.subr.mxu0 0.0
    %266 = vmatpush1.xpose.msra.mxu0 0.0
    %267 = vmatprep.subr.mxu0 0.0
    %268 = vmatpush1.xpose.msra.mxu0 0.0
    %269 = vmatprep.subr.mxu0 0.0
    %270 = vmatpush1.xpose.msra.mxu0 0.0
    %271 = vmatprep.subr.mxu0 0.0
    %272 = vmatpush1.xpose.msra.mxu0 0.0
    %273 = vmatprep.subr.mxu0 0.0
    %274 = vmatpush1.xpose.msra.mxu0 0.0
    %275 = vmatprep.subr.mxu0 0.0
    %276 = vmatpush1.xpose.msra.mxu0 0.0
    %277 = vmatprep.subr.mxu0 0.0
    %278 = vmatpush1.xpose.msra.mxu0 0.0
    %279 = vmatprep.subr.mxu0 0.0
    %280 = vmatpush1.xpose.msra.mxu0 0.0
    %281 = vmatprep.subr.mxu0 0.0
    %282 = vmatpush1.xpose.msra.mxu0 0.0
    %283 = vmatprep.subr.mxu0 0.0
    %284 = vmatpush1.xpose.msra.mxu0 0.0
    %285 = vmatprep.subr.mxu0 0.0
    %286 = vmatpush1.xpose.msra.mxu0 0.0
    %287 = vmatprep.subr.mxu0 0.0
    %288 = vmatpush1.xpose.msra.mxu0 0.0
    %289 = vmatprep.subr.mxu0 0.0
    %290 = vmatpush1.xpose.msra.mxu0 0.0
    %291 = vmatprep.subr.mxu0 0.0
    %292 = vmatpush1.xpose.msra.mxu0 0.0
    %293 = vmatprep.subr.mxu0 0.0
    %294 = vmatpush1.xpose.msra.mxu0 0.0
    %295 = vmatprep.subr.mxu0 0.0
    %296 = vmatpush1.xpose.msra.mxu0 0.0
    %297 = vmatprep.subr.mxu0 0.0
    %298 = vmatpush1.xpose.msra.mxu0 0.0
    %299 = vmatprep.subr.mxu0 0.0
    %300 = vmatpush1.xpose.msra.mxu0 0.0
    %301 = vmatprep.subr.mxu0 0.0
    %302 = vmatpush1.xpose.msra.mxu0 0.0
    %303 = vmatprep.subr.mxu0 0.0
    %304 = vmatpush1.xpose.msra.mxu0 0.0
    %305 = vmatprep.subr.mxu0 0.0
    %306 = vmatpush1.xpose.msra.mxu0 0.0
    %307 = vmatprep.subr.mxu0 0.0
    %308 = vmatpush1.xpose.msra.mxu0 0.0
    %309 = vmatprep.subr.mxu0 0.0
    %310 = vmatpush1.xpose.msra.mxu0 0.0
    %311 = vmatprep.mubr.f32.mxu0 0.0
    %312 = vmatmul.mubr.f32.gmra.mrb[0].mxu0 %v246
    %v313 = vpop.f32.mrb[0].mxu0
    %v314 = vadd.f32 0.0, %v313
    %v315 = vpop.f32.mrb[0].mxu0
    %316 = vdwg.mxu0
    %vm317 = vcmask 57344
    %318 = vst.msk [vmem:[#allocation8] sm:$0x1] %vm317, %v314
    // Predicated region
    $region38: #{tpu_custom_call.1} parent=1 // pred_check
      _
    $region39: #{tpu_custom_call.1} parent=1 // pred_check_branch
      %320 = sbr.rel (0) target = $region41
    $region40: #{tpu_custom_call.1} parent=1 // pred_region
      %s322 = ssub.s32 16, 16
      %323 = vsyncadd [#allocation4], %s322
      %s325 = sshll.u32 [#allocation8], 4
      %s326 = int_to_ptr.vmem [resolvable:$true] %s325
      %328 = dma.vmem_to_hbm [thread:$0]  %s326, 16, %s6, [#allocation4]
    $region41: #{tpu_custom_call.1} parent=1 // pred_fallthru
      _
    // Predicated region
    $region42: #{tpu_custom_call.1} parent=1 // pred_check
      _
    $region43: #{tpu_custom_call.1} parent=1 // pred_check_branch
      %330 = sbr.rel (0) target = $region45
    $region44: #{tpu_custom_call.1} parent=1 // pred_region
      %331 = dma.done [#allocation4], 16
    $region45: #{tpu_custom_call.1} parent=1 // pred_fallthru
      _
    %332 = vsyncpa [#allocation3], 1
    %333 = vsyncpa [#allocation6], 1
    %334 = vsyncpa [#allocation4], 1

</llo_original>
